<compile_context>
chip_gen: v6e
topology: v6e:2x2x1
jax: 0.10.0
libtpu: 0.0.40
codegen_flags: <defaults>
</compile_context>

<pallas_src>
import functools

import jax
import jax.numpy as jnp
from jax.experimental import pallas as pl
from jax.experimental.pallas import tpu as pltpu


def _round_up(n, m):
    return (n + m - 1) // m * m


# ----------------------------------------------------------------------------
# Kernels
# ----------------------------------------------------------------------------
def _bnet_kernel_det(x_ref, w1_ref, b1_ref, w2_ref, b2_ref, o_ref):
    """Deterministic forward: relu(x @ W1 + b1) @ W2 + b2."""
    h = jnp.dot(x_ref[...], w1_ref[...], preferred_element_type=jnp.float32)
    h = jnp.maximum(h + b1_ref[...], 0.0)
    out = jnp.dot(h, w2_ref[...], preferred_element_type=jnp.float32)
    o_ref[...] = (out + b2_ref[...]).astype(o_ref.dtype)


def _bnet_kernel_mc(x_ref, w1_ref, b1_ref, w2_ref, b2_ref,
                    bits1_ref, bits2_ref, o_ref, *, dropout_rate):
    """One MC-dropout sample per grid step.

    Dropout matches PyTorch F.dropout semantics (inverted dropout applied
    after the hidden ReLU AND after fc2, scaled by 1/keep), using a single
    integer-threshold compare per element: keep iff bits < keep * 2^32.
    """
    keep = 1.0 - float(dropout_rate)

    h = jnp.dot(x_ref[...], w1_ref[...], preferred_element_type=jnp.float32)
    h = jnp.maximum(h + b1_ref[...], 0.0)

    if dropout_rate > 0.0:  # static Python branch (baked via functools.partial)
        thresh = jnp.uint32(min(int(keep * 4294967296.0), 4294967295))
        inv_keep = jnp.float32(1.0 / keep)
        h = jnp.where(bits1_ref[...] < thresh, h * inv_keep, 0.0)

    out = jnp.dot(h, w2_ref[...], preferred_element_type=jnp.float32)
    out = out + b2_ref[...]

    if dropout_rate > 0.0:
        out = jnp.where(bits2_ref[...] < thresh, out * inv_keep, 0.0)

    o_ref[...] = out.astype(o_ref.dtype)


# ----------------------------------------------------------------------------
# Wrapper
# ----------------------------------------------------------------------------
def bnet_mcd_forward(data, params, *, apply_dropout=False, dropout_rate=0.5,
                     num_samples=1, key=None):
    """data: (T, B, H, W) stack of frames (last one is used), or (B, H, W).

    Returns (B, O) when apply_dropout=False (PyTorch forward semantics),
    and (num_samples, B, O) when apply_dropout=True (all MC samples computed
    in a single fused pallas_call).
    """
    x = data[-1]                        # data[-1]
    B = x.shape[0]
    x = x.reshape(B, -1).astype(jnp.float32)   # x.view(x.size(0), -1)

    w1, b1, w2, b2 = params             # w1: (F, Hd), b1: (1, Hd), w2: (Hd, O), b2: (1, O)
    F_, Hd = w1.shape
    O = w2.shape[1]

    # Pad batch to a multiple of 8 (full sublanes / better MXU row occupancy).
    B_pad = _round_up(B, 8)
    if B_pad != B:
        x = jnp.pad(x, ((0, B_pad - B), (0, 0)))

    # Constant index maps -> these operands are fetched once and stay
    # VMEM-resident across the entire (sample) grid.
    const2 = lambda i: (0, 0)
    resident_specs = [
        pl.BlockSpec((B_pad, F_), const2),   # x
        pl.BlockSpec((F_, Hd), const2),      # W1
        pl.BlockSpec((1, Hd), const2),       # b1
        pl.BlockSpec((Hd, O), const2),       # W2
        pl.BlockSpec((1, O), const2),        # b2
    ]

    if not apply_dropout:
        out = pl.pallas_call(
            _bnet_kernel_det,
            out_shape=jax.ShapeDtypeStruct((B_pad, O), jnp.float32),
            grid=(1,),
            in_specs=resident_specs,
            out_specs=pl.BlockSpec((B_pad, O), const2),
            compiler_params=pltpu.CompilerParams(
                dimension_semantics=("arbitrary",)),
        )(x, w1, b1, w2, b2)
        return out[:B]

    # ---- MC-dropout: all samples fused into one pallas_call -----------------
    N = int(num_samples)
    if key is None:
        key = jax.random.PRNGKey(0)
    k1, k2 = jax.random.split(key)
    # Independent mask bits per sample (tiny arrays at this scale).
    bits1 = jax.random.bits(k1, (N, B_pad, Hd), dtype=jnp.uint32)
    bits2 = jax.random.bits(k2, (N, B_pad, O), dtype=jnp.uint32)

    kernel = functools.partial(_bnet_kernel_mc,
                               dropout_rate=float(dropout_rate))

    per_sample = lambda i: (i, 0, 0)
    out = pl.pallas_call(
        kernel,
        out_shape=jax.ShapeDtypeStruct((N, B_pad, O), jnp.float32),
        grid=(N,),
        in_specs=resident_specs + [
            pl.BlockSpec((None, B_pad, Hd), per_sample),   # bits1 (leading dim squeezed)
            pl.BlockSpec((None, B_pad, O), per_sample),    # bits2
        ],
        out_specs=pl.BlockSpec((None, B_pad, O), per_sample),
        compiler_params=pltpu.CompilerParams(
            # "parallel" lets v7x shard the sample axis across its 2 TCs;
            # harmless (no-op) on v5e/v6e.
            dimension_semantics=("parallel",)),
    )(x, w1, b1, w2, b2, bits1, bits2)
    return out[:, :B, :]


# ----------------------------------------------------------------------------
# Params / reference
# ----------------------------------------------------------------------------
def init_params(input_shape, hidden_size, output_size, key):
    """Synthetic init matching nn.Linear shapes (stored transposed)."""
    flattened = input_shape[1] * input_shape[2]
    k1, k2, k3, k4 = jax.random.split(key, 4)
    bound1 = 1.0 / jnp.sqrt(flattened)
    bound2 = 1.0 / jnp.sqrt(hidden_size)
    w1 = jax.random.uniform(k1, (flattened, hidden_size), jnp.float32,
                            -bound1, bound1)
    b1 = jax.random.uniform(k2, (1, hidden_size), jnp.float32, -bound1, bound1)
    w2 = jax.random.uniform(k3, (hidden_size, output_size), jnp.float32,
                            -bound2, bound2)
    b2 = jax.random.uniform(k4, (1, output_size), jnp.float32, -bound2, bound2)
    return w1, b1, w2, b2


def reference_forward(data, params):
    x = data[-1]
    x = x.reshape(x.shape[0], -1)
    w1, b1, w2, b2 = params
    h = jnp.maximum(x @ w1 + b1, 0.0)
    return h @ w2 + b2


if __name__ == "__main__":
    key = jax.random.PRNGKey(0)
    k_data, k_params, k_mc = jax.random.split(key, 3)

    # input_shape = (C, H, W) = (1, 16, 16)  ->  flattened = 256
    input_shape = (1, 16, 16)
    hidden_size = 32
    output_size = 8
    B = 2
    T = 3  # stack of frames; forward uses data[-1]

    data = jax.random.normal(k_data, (T, B, input_shape[1], input_shape[2]),
                             dtype=jnp.float32)
    params = init_params(input_shape, hidden_size, output_size, k_params)

    # 1) Deterministic path (default forward semantics) vs. reference.
    out = jax.block_until_ready(bnet_mcd_forward(data, params,
                                                 apply_dropout=False))
    ref = reference_forward(data, params)
    assert out.shape == (B, output_size)
    assert jnp.allclose(out, ref, atol=1e-4, rtol=1e-4), "mismatch vs reference"

    # 2) MC path with p=0 must reproduce the deterministic output for every
    #    fused sample (checks the sample-grid plumbing exactly).
    out_p0 = jax.block_until_ready(
        bnet_mcd_forward(data, params, apply_dropout=True, dropout_rate=0.0,
                         num_samples=4, key=k_mc))
    assert out_p0.shape == (4, B, output_size)
    assert jnp.allclose(out_p0, jnp.broadcast_to(ref, (4, B, output_size)),
                        atol=1e-4, rtol=1e-4), "p=0 MC path mismatch"

    # 3) MC-dropout path: 8 stochastic samples in ONE pallas_call.
    out_mc = jax.block_until_ready(
        bnet_mcd_forward(data, params, apply_dropout=True, dropout_rate=0.5,
                         num_samples=8, key=k_mc))
    assert out_mc.shape == (8, B, output_size)
    assert bool(jnp.std(out_mc, axis=0).max() > 0.0), "MC samples identical"

    print("KERNEL_OK")
</pallas_src>

<mosaic_0001>
module attributes {stable_mosaic.version = 11 : i64} {
  func.func @_bnet_kernel_det(%arg0: i32, %arg1: memref<8x256xf32, #tpu.memory_space<vmem>>, %arg2: memref<256x32xf32, #tpu.memory_space<vmem>>, %arg3: memref<1x32xf32, #tpu.memory_space<vmem>>, %arg4: memref<32x8xf32, #tpu.memory_space<vmem>>, %arg5: memref<1x8xf32, #tpu.memory_space<vmem>>, %arg6: memref<8x8xf32, #tpu.memory_space<vmem>>) attributes {dimension_semantics = [#tpu.dimension_semantics<arbitrary>], iteration_bounds = array<i64: 1>, scalar_prefetch = 0 : i64, scratch_operands = 0 : i64, tpu.core_type = #tpu.core_type<tc>, window_params = [{pipeline_mode = #tpu.pipeline_mode<synchronous>, transform_indices = @transform_0, window_bounds = array<i64: 8, 256>}, {pipeline_mode = #tpu.pipeline_mode<synchronous>, transform_indices = @transform_1, window_bounds = array<i64: 256, 32>}, {pipeline_mode = #tpu.pipeline_mode<synchronous>, transform_indices = @transform_2, window_bounds = array<i64: 1, 32>}, {pipeline_mode = #tpu.pipeline_mode<synchronous>, transform_indices = @transform_3, window_bounds = array<i64: 32, 8>}, {pipeline_mode = #tpu.pipeline_mode<synchronous>, transform_indices = @transform_4, window_bounds = array<i64: 1, 8>}, {pipeline_mode = #tpu.pipeline_mode<synchronous>, transform_indices = @transform_5, window_bounds = array<i64: 8, 8>}]} {
    %c0 = arith.constant 0 : index
    %c0_0 = arith.constant 0 : index
    %0 = vector.load %arg1[%c0, %c0_0] : memref<8x256xf32, #tpu.memory_space<vmem>>, vector<8x256xf32>
    %c0_1 = arith.constant 0 : index
    %c0_2 = arith.constant 0 : index
    %1 = vector.load %arg2[%c0_1, %c0_2] : memref<256x32xf32, #tpu.memory_space<vmem>>, vector<256x32xf32>
    %cst = arith.constant dense<0.000000e+00> : vector<8x32xf32>
    %2 = tpu.matmul %0, %1, %cst {dimension_numbers = #tpu.dot_dimension_numbers<[1], [0], [0], [1], [0, 0, 1, 1], [], []>} : vector<8x256xf32>, vector<256x32xf32>, vector<8x32xf32> -> vector<8x32xf32>
    %c0_3 = arith.constant 0 : index
    %c0_4 = arith.constant 0 : index
    %3 = vector.load %arg3[%c0_3, %c0_4] : memref<1x32xf32, #tpu.memory_space<vmem>>, vector<1x32xf32>
    %4 = vector.broadcast %3 : vector<1x32xf32> to vector<8x32xf32>
    %5 = arith.addf %2, %4 : vector<8x32xf32>
    %cst_5 = arith.constant 0.000000e+00 : f32
    %6 = vector.broadcast %cst_5 : f32 to vector<8x32xf32>
    %7 = arith.maximumf %5, %6 : vector<8x32xf32>
    %c0_6 = arith.constant 0 : index
    %c0_7 = arith.constant 0 : index
    %8 = vector.load %arg4[%c0_6, %c0_7] : memref<32x8xf32, #tpu.memory_space<vmem>>, vector<32x8xf32>
    %cst_8 = arith.constant dense<0.000000e+00> : vector<8x8xf32>
    %9 = tpu.matmul %7, %8, %cst_8 {dimension_numbers = #tpu.dot_dimension_numbers<[1], [0], [0], [1], [0, 0, 1, 1], [], []>} : vector<8x32xf32>, vector<32x8xf32>, vector<8x8xf32> -> vector<8x8xf32>
    %c0_9 = arith.constant 0 : index
    %c0_10 = arith.constant 0 : index
    %10 = vector.load %arg5[%c0_9, %c0_10] : memref<1x8xf32, #tpu.memory_space<vmem>>, vector<1x8xf32>
    %11 = vector.broadcast %10 : vector<1x8xf32> to vector<8x8xf32>
    %12 = arith.addf %9, %11 : vector<8x8xf32>
    %c0_11 = arith.constant 0 : index
    %c0_12 = arith.constant 0 : index
    %13 = vector.load %arg6[%c0_11, %c0_12] : memref<8x8xf32, #tpu.memory_space<vmem>>, vector<8x8xf32>
    tpu.vector_store %arg6[%c0_11, %c0_12], %12 {strides = array<i32>} : memref<8x8xf32, #tpu.memory_space<vmem>>, vector<8x8xf32>,
    return
  }
  func.func @transform_0(%arg0: i32) -> (i32, i32) {
    %c0_i32 = arith.constant 0 : i32
    %c0_i32_0 = arith.constant 0 : i32
    %c0_i32_1 = arith.constant 0 : i32
    return %c0_i32, %c0_i32_0 : i32, i32
  }
  func.func @transform_1(%arg0: i32) -> (i32, i32) {
    %c0_i32 = arith.constant 0 : i32
    %c0_i32_0 = arith.constant 0 : i32
    %c0_i32_1 = arith.constant 0 : i32
    return %c0_i32, %c0_i32_0 : i32, i32
  }
  func.func @transform_2(%arg0: i32) -> (i32, i32) {
    %c0_i32 = arith.constant 0 : i32
    %c0_i32_0 = arith.constant 0 : i32
    %c0_i32_1 = arith.constant 0 : i32
    return %c0_i32, %c0_i32_0 : i32, i32
  }
  func.func @transform_3(%arg0: i32) -> (i32, i32) {
    %c0_i32 = arith.constant 0 : i32
    %c0_i32_0 = arith.constant 0 : i32
    %c0_i32_1 = arith.constant 0 : i32
    return %c0_i32, %c0_i32_0 : i32, i32
  }
  func.func @transform_4(%arg0: i32) -> (i32, i32) {
    %c0_i32 = arith.constant 0 : i32
    %c0_i32_0 = arith.constant 0 : i32
    %c0_i32_1 = arith.constant 0 : i32
    return %c0_i32, %c0_i32_0 : i32, i32
  }
  func.func @transform_5(%arg0: i32) -> (i32, i32) {
    %c0_i32 = arith.constant 0 : i32
    %c0_i32_0 = arith.constant 0 : i32
    %c0_i32_1 = arith.constant 0 : i32
    return %c0_i32, %c0_i32_0 : i32, i32
  }
}

</mosaic_0001>

<llo_original>
// kernel: tpu_custom_call.1
$region0: #{tpu_custom_call.1}
  #allocation0 [shape = 'u32[]', space=smem, size = 0x4, offset = 0x4, fixed_abs, tag = 'smem constant byte address 0x4 - core index']
  #allocation1 [shape = 'u32[144,128]{1,0:T(1,128)}', space=vmem, size = 0x12000, scoped, tag = 'internal scratch']
  %s0 = inlined_call_operand.vmem [shape: f32[8,256], index: 0, kind: input, shape index: {}]
  %s1 = inlined_call_operand.vmem [shape: f32[256,32], index: 1, kind: input, shape index: {}]
  %s2 = inlined_call_operand.vmem [shape: f32[1,32], index: 2, kind: input, shape index: {}]
  %s3 = inlined_call_operand.vmem [shape: f32[32,8], index: 3, kind: input, shape index: {}]
  %s4 = inlined_call_operand.vmem [shape: f32[1,8], index: 4, kind: input, shape index: {}]
  %s5 = inlined_call_operand.hbm [shape: f32[8,8], index: 5, kind: output, shape index: {}]
  %s6 = sld [smem:[#allocation0]]
  $region30: #{tpu_custom_call.1} parent=0
    _
  %s8 = ssub.s32 1, %s6
  %s9 = scalar_select 0, %s8, %s6
  $region1: #{tpu_custom_call.1} parent=0
    #allocation2 [shape = 'u8[4096]{0}', space=vmem, size = 0x1000, scoped, tag = 'output window, operand 0, single buffered']
    #allocation3 [shape = 's32[1]{0}', space=sflag, size = 0x4, scoped, tag = 'scoped memory for tpu_custom_call.1']
    %10 = vsyncpa [#allocation3], 0
    // Predicated region
    $region2: #{tpu_custom_call.1} parent=1 // pred_check
      _
    $region3: #{tpu_custom_call.1} parent=1 // pred_check_branch
      %12 = sbr.rel (0) target = $region5
    $region4: #{tpu_custom_call.1} parent=1 // pred_region
      _
    $region5: #{tpu_custom_call.1} parent=1 // pred_fallthru
      _
    // Predicated region
    $region6: #{tpu_custom_call.1} parent=1 // pred_check
      _
    $region7: #{tpu_custom_call.1} parent=1 // pred_check_branch
      %14 = sbr.rel (0) target = $region9
    $region8: #{tpu_custom_call.1} parent=1 // pred_region
      _
    $region9: #{tpu_custom_call.1} parent=1 // pred_fallthru
      _
    // Predicated region
    $region10: #{tpu_custom_call.1} parent=1 // pred_check
      _
    $region11: #{tpu_custom_call.1} parent=1 // pred_check_branch
      %16 = sbr.rel (0) target = $region13
    $region12: #{tpu_custom_call.1} parent=1 // pred_region
      _
    $region13: #{tpu_custom_call.1} parent=1 // pred_fallthru
      _
    // Predicated region
    $region14: #{tpu_custom_call.1} parent=1 // pred_check
      _
    $region15: #{tpu_custom_call.1} parent=1 // pred_check_branch
      %18 = sbr.rel (0) target = $region17
    $region16: #{tpu_custom_call.1} parent=1 // pred_region
      _
    $region17: #{tpu_custom_call.1} parent=1 // pred_fallthru
      _
    // Predicated region
    $region18: #{tpu_custom_call.1} parent=1 // pred_check
      _
    $region19: #{tpu_custom_call.1} parent=1 // pred_check_branch
      %20 = sbr.rel (0) target = $region21
    $region20: #{tpu_custom_call.1} parent=1 // pred_region
      _
    $region21: #{tpu_custom_call.1} parent=1 // pred_fallthru
      _
    %v21 = vld [vmem:[%s0] sm:$0xff]
    %v22 = vld [vmem:[%s0 + $0x8] sm:$0xff]
    %v23 = vld [vmem:[%s1] sm:$0xff]
    %v24 = vld [vmem:[%s1 + $0x8] sm:$0xff]
    %v25 = vld [vmem:[%s1 + $0x10] sm:$0xff]
    %v26 = vld [vmem:[%s1 + $0x18] sm:$0xff]
    %v27 = vld [vmem:[%s1 + $0x20] sm:$0xff]
    %v28 = vld [vmem:[%s1 + $0x28] sm:$0xff]
    %v29 = vld [vmem:[%s1 + $0x30] sm:$0xff]
    %v30 = vld [vmem:[%s1 + $0x38] sm:$0xff]
    %v31 = vld [vmem:[%s1 + $0x40] sm:$0xff]
    %v32 = vld [vmem:[%s1 + $0x48] sm:$0xff]
    %v33 = vld [vmem:[%s1 + $0x50] sm:$0xff]
    %v34 = vld [vmem:[%s1 + $0x58] sm:$0xff]
    %v35 = vld [vmem:[%s1 + $0x60] sm:$0xff]
    %v36 = vld [vmem:[%s1 + $0x68] sm:$0xff]
    %v37 = vld [vmem:[%s1 + $0x70] sm:$0xff]
    %v38 = vld [vmem:[%s1 + $0x78] sm:$0xff]
    %v39 = vld [vmem:[%s1 + $0x80] sm:$0xff]
    %v40 = vld [vmem:[%s1 + $0x88] sm:$0xff]
    %v41 = vld [vmem:[%s1 + $0x90] sm:$0xff]
    %v42 = vld [vmem:[%s1 + $0x98] sm:$0xff]
    %v43 = vld [vmem:[%s1 + $0xa0] sm:$0xff]
    %v44 = vld [vmem:[%s1 + $0xa8] sm:$0xff]
    %v45 = vld [vmem:[%s1 + $0xb0] sm:$0xff]
    %v46 = vld [vmem:[%s1 + $0xb8] sm:$0xff]
    %v47 = vld [vmem:[%s1 + $0xc0] sm:$0xff]
    %v48 = vld [vmem:[%s1 + $0xc8] sm:$0xff]
    %v49 = vld [vmem:[%s1 + $0xd0] sm:$0xff]
    %v50 = vld [vmem:[%s1 + $0xd8] sm:$0xff]
    %v51 = vld [vmem:[%s1 + $0xe0] sm:$0xff]
    %v52 = vld [vmem:[%s1 + $0xe8] sm:$0xff]
    %v53 = vld [vmem:[%s1 + $0xf0] sm:$0xff]
    %v54 = vld [vmem:[%s1 + $0xf8] sm:$0xff]
    %v55 = vld [vmem:[%s2] sm:$0x1]
    %v57 = vlaneseq
    %v58 = vshrl.u32 %v57, 7
    %v59 = vsub.s32 0, %v58
    %v60 = vrot.slane %v55, %v59
    %62 = vmatprep.subr.mxu0 0.0
    %63 = vmatpush1.msra.mxu0 %v38
    %64 = vmatprep.subr.mxu0 0.0
    %65 = vmatpush1.msra.mxu0 %v37
    %66 = vmatprep.subr.mxu0 0.0
    %67 = vmatpush1.msra.mxu0 %v36
    %68 = vmatprep.subr.mxu0 0.0
    %69 = vmatpush1.msra.mxu0 %v35
    %70 = vmatprep.subr.mxu0 0.0
    %71 = vmatpush1.msra.mxu0 %v34
    %72 = vmatprep.subr.mxu0 0.0
    %73 = vmatpush1.msra.mxu0 %v33
    %74 = vmatprep.subr.mxu0 0.0
    %75 = vmatpush1.msra.mxu0 %v32
    %76 = vmatprep.subr.mxu0 0.0
    %77 = vmatpush1.msra.mxu0 %v31
    %78 = vmatprep.subr.mxu0 0.0
    %79 = vmatpush1.msra.mxu0 %v30
    %80 = vmatprep.subr.mxu0 0.0
    %81 = vmatpush1.msra.mxu0 %v29
    %82 = vmatprep.subr.mxu0 0.0
    %83 = vmatpush1.msra.mxu0 %v28
    %84 = vmatprep.subr.mxu0 0.0
    %85 = vmatpush1.msra.mxu0 %v27
    %86 = vmatprep.subr.mxu0 0.0
    %87 = vmatpush1.msra.mxu0 %v26
    %88 = vmatprep.subr.mxu0 0.0
    %89 = vmatpush1.msra.mxu0 %v25
    %90 = vmatprep.subr.mxu0 0.0
    %91 = vmatpush1.msra.mxu0 %v24
    %92 = vmatprep.subr.mxu0 0.0
    %93 = vmatpush1.msra.mxu0 %v23
    %94 = vmatprep.subr.mxu0 0.0
    %95 = vmatpush2.msra.mxu0 %v54
    %96 = vmatprep.subr.mxu0 0.0
    %97 = vmatpush2.msra.mxu0 %v53
    %98 = vmatprep.subr.mxu0 0.0
    %99 = vmatpush2.msra.mxu0 %v52
    %100 = vmatprep.subr.mxu0 0.0
    %101 = vmatpush2.msra.mxu0 %v51
    %102 = vmatprep.subr.mxu0 0.0
    %103 = vmatpush2.msra.mxu0 %v50
    %104 = vmatprep.subr.mxu0 0.0
    %105 = vmatpush2.msra.mxu0 %v49
    %106 = vmatprep.subr.mxu0 0.0
    %107 = vmatpush2.msra.mxu0 %v48
    %108 = vmatprep.subr.mxu0 0.0
    %109 = vmatpush2.msra.mxu0 %v47
    %110 = vmatprep.subr.mxu0 0.0
    %111 = vmatpush2.msra.mxu0 %v46
    %112 = vmatprep.subr.mxu0 0.0
    %113 = vmatpush2.msra.mxu0 %v45
    %114 = vmatprep.subr.mxu0 0.0
    %115 = vmatpush2.msra.mxu0 %v44
    %116 = vmatprep.subr.mxu0 0.0
    %117 = vmatpush2.msra.mxu0 %v43
    %118 = vmatprep.subr.mxu0 0.0
    %119 = vmatpush2.msra.mxu0 %v42
    %120 = vmatprep.subr.mxu0 0.0
    %121 = vmatpush2.msra.mxu0 %v41
    %122 = vmatprep.subr.mxu0 0.0
    %123 = vmatpush2.msra.mxu0 %v40
    %124 = vmatprep.subr.mxu0 0.0
    %125 = vmatpush2.msra.mxu0 %v39
    %126 = vmatprep.mubr.f32.mxu0 %v22
    %127 = vmatmul.mubr.f32.gmra.mxu0 %v21
    %v128 = vpop.f32.mrf.mxu0
    %v129 = vadd.f32 %v60, %v128
    %v130 = vpop.f32.mrf.mxu0
    %131 = vdwg.mxu0
    %v132 = vmax.f32 %v129, 0.0
    %v133 = vld [vmem:[%s3] sm:$0xff]
    %v134 = vld [vmem:[%s3 + $0x8] sm:$0xff]
    %v135 = vld [vmem:[%s3 + $0x10] sm:$0xff]
    %v136 = vld [vmem:[%s3 + $0x18] sm:$0xff]
    %v137 = vld [vmem:[%s4] sm:$0x1]
    %v139 = vlaneseq
    %v140 = vshrl.u32 %v139, 7
    %v141 = vsub.s32 0, %v140
    %v142 = vrot.slane %v137, %v141
    %vm144 = vcmask 261120
    %v146 = vsel %vm144, %v132, 0
    %148 = vmatprep.subr.mxu0 0.0
    %149 = vmatpush1.msra.mxu0 0.0
    %150 = vmatprep.subr.mxu0 0.0
    %151 = vmatpush1.msra.mxu0 0.0
    %152 = vmatprep.subr.mxu0 0.0
    %153 = vmatpush1.msra.mxu0 0.0
    %154 = vmatprep.subr.mxu0 0.0
    %155 = vmatpush1.msra.mxu0 0.0
    %156 = vmatprep.subr.mxu0 0.0
    %157 = vmatpush1.msra.mxu0 0.0
    %158 = vmatprep.subr.mxu0 0.0
    %159 = vmatpush1.msra.mxu0 0.0
    %160 = vmatprep.subr.mxu0 0.0
    %161 = vmatpush1.msra.mxu0 0.0
    %162 = vmatprep.subr.mxu0 0.0
    %163 = vmatpush1.msra.mxu0 0.0
    %164 = vmatprep.subr.mxu0 0.0
    %165 = vmatpush1.msra.mxu0 0.0
    %166 = vmatprep.subr.mxu0 0.0
    %167 = vmatpush1.msra.mxu0 0.0
    %168 = vmatprep.subr.mxu0 0.0
    %169 = vmatpush1.msra.mxu0 0.0
    %170 = vmatprep.subr.mxu0 0.0
    %171 = vmatpush1.msra.mxu0 0.0
    %172 = vmatprep.subr.mxu0 0.0
    %173 = vmatpush1.msra.mxu0 %v136
    %174 = vmatprep.subr.mxu0 0.0
    %175 = vmatpush1.msra.mxu0 %v135
    %176 = vmatprep.subr.mxu0 0.0
    %177 = vmatpush1.msra.mxu0 %v134
    %178 = vmatprep.subr.mxu0 0.0
    %179 = vmatpush1.msra.mxu0 %v133
    %180 = vmatprep.subr.mxu0 0.0
    %181 = vmatpush2.msra.mxu0 0.0
    %182 = vmatprep.subr.mxu0 0.0
    %183 = vmatpush2.msra.mxu0 0.0
    %184 = vmatprep.subr.mxu0 0.0
    %185 = vmatpush2.msra.mxu0 0.0
    %186 = vmatprep.subr.mxu0 0.0
    %187 = vmatpush2.msra.mxu0 0.0
    %188 = vmatprep.subr.mxu0 0.0
    %189 = vmatpush2.msra.mxu0 0.0
    %190 = vmatprep.subr.mxu0 0.0
    %191 = vmatpush2.msra.mxu0 0.0
    %192 = vmatprep.subr.mxu0 0.0
    %193 = vmatpush2.msra.mxu0 0.0
    %194 = vmatprep.subr.mxu0 0.0
    %195 = vmatpush2.msra.mxu0 0.0
    %196 = vmatprep.subr.mxu0 0.0
    %197 = vmatpush2.msra.mxu0 0.0
    %198 = vmatprep.subr.mxu0 0.0
    %199 = vmatpush2.msra.mxu0 0.0
    %200 = vmatprep.subr.mxu0 0.0
    %201 = vmatpush2.msra.mxu0 0.0
    %202 = vmatprep.subr.mxu0 0.0
    %203 = vmatpush2.msra.mxu0 0.0
    %204 = vmatprep.subr.mxu0 0.0
    %205 = vmatpush2.msra.mxu0 0.0
    %206 = vmatprep.subr.mxu0 0.0
    %207 = vmatpush2.msra.mxu0 0.0
    %208 = vmatprep.subr.mxu0 0.0
    %209 = vmatpush2.msra.mxu0 0.0
    %210 = vmatprep.subr.mxu0 0.0
    %211 = vmatpush2.msra.mxu0 0.0
    %212 = vmatprep.mubr.f32.mxu0 0.0
    %213 = vmatmul.mubr.f32.gmra.mxu0 %v146
    %v214 = vpop.f32.mrf.mxu0
    %v215 = vadd.f32 %v142, %v214
    %v216 = vpop.f32.mrf.mxu0
    %217 = vdwg.mxu0
    %vm218 = vcmask 64512
    %219 = vst.msk [vmem:[#allocation2] sm:$0xff] %vm218, %v215
    // Predicated region
    $region22: #{tpu_custom_call.1} parent=1 // pred_check
      _
    $region23: #{tpu_custom_call.1} parent=1 // pred_check_branch
      %221 = sbr.rel (0) target = $region25
    $region24: #{tpu_custom_call.1} parent=1 // pred_region
      %s223 = ssub.s32 128, 128
      %224 = vsyncadd [#allocation3], %s223
      %s226 = sshll.u32 [#allocation2], 4
      %s227 = int_to_ptr.vmem [resolvable:$true] %s226
      %229 = dma.vmem_to_hbm [thread:$0]  %s227, 128, %s5, [#allocation3]
    $region25: #{tpu_custom_call.1} parent=1 // pred_fallthru
      _
    // Predicated region
    $region26: #{tpu_custom_call.1} parent=1 // pred_check
      _
    $region27: #{tpu_custom_call.1} parent=1 // pred_check_branch
      %231 = sbr.rel (0) target = $region29
    $region28: #{tpu_custom_call.1} parent=1 // pred_region
      %232 = dma.done [#allocation3], 128
    $region29: #{tpu_custom_call.1} parent=1 // pred_fallthru
      _
    %233 = vsyncpa [#allocation3], 1

</llo_original>
